<compile_context>
chip_gen: v6e
topology: v6e:2x2x1
jax: 0.10.0
libtpu: 0.0.40
codegen_flags: <defaults>
</compile_context>

<pallas_src>
import jax
import jax.numpy as jnp
from jax import lax
from jax.experimental import pallas as pl
from jax.experimental.pallas import tpu as pltpu


def _round_up(x, m):
    return ((x + m - 1) // m) * m


# --------------------- single-step kernel (tiny problems) ----------------------
def _linear_single_kernel(x_ref, w_ref, b_ref, o_ref):
    o_ref[...] = (
        jnp.dot(x_ref[...], w_ref[...], preferred_element_type=jnp.float32)
        + b_ref[...]
    ).astype(o_ref.dtype)


# --------------------- K-tiled kernel (large tfidf_dim / batch) ----------------
def _make_ktiled_kernel(d_total, tk, mask_needed):
    """o[m] = sum_k x[m,k] @ w[k] + b, accumulating directly into o_ref (f32).

    If D is not a multiple of tk, the last K tile is partial: the out-of-range
    columns of x / rows of w are unspecified after the DMA, so they are masked
    to zero in-register (cheap VALU work; the kernel is HBM-bound).
    """

    def kernel(x_ref, w_ref, b_ref, o_ref):
        k = pl.program_id(1)

        @pl.when(k == 0)
        def _init():
            # Fold the bias into the accumulator init (no epilogue add).
            o_ref[...] = jnp.broadcast_to(b_ref[...], o_ref.shape)

        x = x_ref[...]
        w = w_ref[...]
        if mask_needed:  # static: only emitted when D % tk != 0
            limit = d_total - k * tk
            col = lax.broadcasted_iota(jnp.int32, x.shape, 1)
            row = lax.broadcasted_iota(jnp.int32, w.shape, 0)
            x = jnp.where(col < limit, x, jnp.zeros_like(x))
            w = jnp.where(row < limit, w, jnp.zeros_like(w))

        o_ref[...] += jnp.dot(x, w, preferred_element_type=jnp.float32)

    return kernel


def _tiled_vmem_bytes(tm, tk, c, itemsize):
    # double-buffered x tile + weight K-tile, plus (resident) output & bias.
    return (2 * (tm * tk + tk * c) + 2 * (tm * c + c)) * itemsize


def text_model_forward(x, w_t, b, *, tm=512, tk=2048,
                       max_single_step_bytes=4 * 1024 * 1024,
                       max_single_step_batch=256):
    """Pallas implementation of TextModel.forward for a dense tensor input.

    x   : [B, tfidf_dim]           float32
    w_t : [tfidf_dim, num_classes] float32  (transposed nn.Linear weight)
    b   : [num_classes]            float32
    returns [B, num_classes]       (x.dtype)
    """
    B, D = x.shape
    D2, C = w_t.shape
    assert D == D2
    assert b.shape == (C,)
    out_dtype = x.dtype

    b2 = b.reshape(1, C)  # metadata-only reshape, no HBM pass
    itemsize = jnp.dtype(x.dtype).itemsize
    single_bytes = (B * D + D * C + B * C + C) * itemsize

    # ------------------- single-step path: tiny problems only -------------------
    if single_bytes <= max_single_step_bytes and B <= max_single_step_batch:
        out = pl.pallas_call(
            _linear_single_kernel,
            out_shape=jax.ShapeDtypeStruct((B, C), jnp.float32),
            grid_spec=pltpu.PrefetchScalarGridSpec(
                num_scalar_prefetch=0,
                grid=(1,),
                in_specs=[
                    pl.BlockSpec((B, D), lambda i: (0, 0)),   # full arrays
                    pl.BlockSpec((D, C), lambda i: (0, 0)),
                    pl.BlockSpec((1, C), lambda i: (0, 0)),
                ],
                out_specs=pl.BlockSpec((B, C), lambda i: (0, 0)),
            ),
            compiler_params=pltpu.CompilerParams(
                dimension_semantics=("arbitrary",),
            ),
        )(x, w_t, b2)
        return out.astype(out_dtype)

    # ---------------------------- tiled path ------------------------------------
    # M tile: one full-batch block when possible (weight streamed exactly once),
    # otherwise tm rows (multiple of 8) per block.
    if B <= tm:
        tm_eff = B                       # == full array dim -> always legal
    else:
        tm_eff = max(8, (tm // 8) * 8)

    # K tile: big (default 2048), multiple of 128, shrunk only if VMEM-tight.
    tk_eff = _round_up(min(tk, _round_up(D, 128)), 128)
    vmem_budget = 12 * 1024 * 1024       # fits every gen's default scoped VMEM
    while _tiled_vmem_bytes(tm_eff, tk_eff, C, itemsize) > vmem_budget and tk_eff > 256:
        tk_eff = max(256, _round_up(tk_eff // 2, 128))
    while _tiled_vmem_bytes(tm_eff, tk_eff, C, itemsize) > vmem_budget and tm_eff > 64:
        tm_eff = tm_eff // 2
    if tm_eff != B:
        tm_eff = max(8, (tm_eff // 8) * 8)

    nm = pl.cdiv(B, tm_eff)
    nk = pl.cdiv(D, tk_eff)
    mask_needed = (D % tk_eff) != 0

    kernel = _make_ktiled_kernel(D, tk_eff, mask_needed)

    out = pl.pallas_call(
        kernel,
        out_shape=jax.ShapeDtypeStruct((B, C), jnp.float32),
        grid_spec=pltpu.PrefetchScalarGridSpec(
            num_scalar_prefetch=0,
            grid=(nm, nk),
            in_specs=[
                pl.BlockSpec((tm_eff, tk_eff), lambda m, k: (m, k)),  # x tile
                pl.BlockSpec((tk_eff, C), lambda m, k: (k, 0)),       # weight K-tile
                pl.BlockSpec((1, C), lambda m, k: (0, 0)),            # bias (resident)
            ],
            out_specs=pl.BlockSpec((tm_eff, C), lambda m, k: (m, 0)),
        ),
        compiler_params=pltpu.CompilerParams(
            dimension_semantics=("parallel", "arbitrary"),
        ),
    )(x, w_t, b2)
    return out.astype(out_dtype)


def init_text_model_params(key, tfidf_dim, num_classes):
    """nn.Linear-style init: uniform(-1/sqrt(fan_in), 1/sqrt(fan_in)).

    PyTorch stores weight as [num_classes, tfidf_dim]; we keep the transposed
    [tfidf_dim, num_classes] layout for the kernel.
    """
    kw, kb = jax.random.split(key)
    bound = 1.0 / jnp.sqrt(jnp.float32(tfidf_dim))
    w_t = jax.random.uniform(
        kw, (tfidf_dim, num_classes), jnp.float32, minval=-bound, maxval=bound
    )
    b = jax.random.uniform(
        kb, (num_classes,), jnp.float32, minval=-bound, maxval=bound
    )
    return w_t, b


if __name__ == "__main__":
    key = jax.random.PRNGKey(0)
    k1, k2, k3, k4, k5, k6 = jax.random.split(key, 6)

    # --- Case 1: default non-pretrained TextModel shape -> single-step path.
    B1, D1, C1 = 8, 256, 16
    x1 = jax.random.normal(k1, (B1, D1), jnp.float32)
    w1, b1 = init_text_model_params(k2, D1, C1)
    o1 = jax.block_until_ready(text_model_forward(x1, w1, b1))
    r1 = x1 @ w1 + b1[None, :]
    assert o1.shape == (B1, C1)
    assert jnp.allclose(o1, r1, atol=1e-4, rtol=1e-4)

    # --- Case 2: forced tiled path; partial last M block (200 % 128) and
    #             partial last K tile (3000 % 1024) exercise the in-kernel mask.
    B2, D2, C2 = 200, 3000, 16
    x2 = jax.random.normal(k3, (B2, D2), jnp.float32)
    w2, b2 = init_text_model_params(k4, D2, C2)
    o2 = jax.block_until_ready(
        text_model_forward(x2, w2, b2, tm=128, tk=1024, max_single_step_bytes=0)
    )
    r2 = x2 @ w2 + b2[None, :]
    assert o2.shape == (B2, C2)
    assert jnp.allclose(o2, r2, atol=1e-3, rtol=1e-3)

    # --- Case 3: forced tiled path with exact multiples (no masking),
    #             multi-step K accumulation into the resident output block.
    B3, D3, C3 = 64, 2048, 8
    x3 = jax.random.normal(k5, (B3, D3), jnp.float32)
    w3, b3 = init_text_model_params(k6, D3, C3)
    o3 = jax.block_until_ready(
        text_model_forward(x3, w3, b3, tk=512, max_single_step_bytes=0)
    )
    r3 = x3 @ w3 + b3[None, :]
    assert o3.shape == (B3, C3)
    assert jnp.allclose(o3, r3, atol=1e-3, rtol=1e-3)

    print("KERNEL_OK")
</pallas_src>

<mosaic_0001>
module attributes {stable_mosaic.version = 11 : i64} {
  func.func @_linear_single_kernel(%arg0: i32, %arg1: memref<8x256xf32, #tpu.memory_space<vmem>>, %arg2: memref<256x16xf32, #tpu.memory_space<vmem>>, %arg3: memref<1x16xf32, #tpu.memory_space<vmem>>, %arg4: memref<8x16xf32, #tpu.memory_space<vmem>>) attributes {dimension_semantics = [#tpu.dimension_semantics<arbitrary>], iteration_bounds = array<i64: 1>, scalar_prefetch = 0 : i64, scratch_operands = 0 : i64, tpu.core_type = #tpu.core_type<tc>, window_params = [{pipeline_mode = #tpu.pipeline_mode<synchronous>, transform_indices = @transform_0, window_bounds = array<i64: 8, 256>}, {pipeline_mode = #tpu.pipeline_mode<synchronous>, transform_indices = @transform_1, window_bounds = array<i64: 256, 16>}, {pipeline_mode = #tpu.pipeline_mode<synchronous>, transform_indices = @transform_2, window_bounds = array<i64: 1, 16>}, {pipeline_mode = #tpu.pipeline_mode<synchronous>, transform_indices = @transform_3, window_bounds = array<i64: 8, 16>}]} {
    %c0 = arith.constant 0 : index
    %c0_0 = arith.constant 0 : index
    %0 = vector.load %arg1[%c0, %c0_0] : memref<8x256xf32, #tpu.memory_space<vmem>>, vector<8x256xf32>
    %c0_1 = arith.constant 0 : index
    %c0_2 = arith.constant 0 : index
    %1 = vector.load %arg2[%c0_1, %c0_2] : memref<256x16xf32, #tpu.memory_space<vmem>>, vector<256x16xf32>
    %cst = arith.constant dense<0.000000e+00> : vector<8x16xf32>
    %2 = tpu.matmul %0, %1, %cst {dimension_numbers = #tpu.dot_dimension_numbers<[1], [0], [0], [1], [0, 0, 1, 1], [], []>} : vector<8x256xf32>, vector<256x16xf32>, vector<8x16xf32> -> vector<8x16xf32>
    %c0_3 = arith.constant 0 : index
    %c0_4 = arith.constant 0 : index
    %3 = vector.load %arg3[%c0_3, %c0_4] : memref<1x16xf32, #tpu.memory_space<vmem>>, vector<1x16xf32>
    %4 = vector.broadcast %3 : vector<1x16xf32> to vector<8x16xf32>
    %5 = arith.addf %2, %4 : vector<8x16xf32>
    %c0_5 = arith.constant 0 : index
    %c0_6 = arith.constant 0 : index
    %6 = vector.load %arg4[%c0_5, %c0_6] : memref<8x16xf32, #tpu.memory_space<vmem>>, vector<8x16xf32>
    tpu.vector_store %arg4[%c0_5, %c0_6], %5 {strides = array<i32>} : memref<8x16xf32, #tpu.memory_space<vmem>>, vector<8x16xf32>,
    return
  }
  func.func @transform_0(%arg0: i32) -> (i32, i32) {
    %c0_i32 = arith.constant 0 : i32
    %c0_i32_0 = arith.constant 0 : i32
    %c0_i32_1 = arith.constant 0 : i32
    return %c0_i32, %c0_i32_0 : i32, i32
  }
  func.func @transform_1(%arg0: i32) -> (i32, i32) {
    %c0_i32 = arith.constant 0 : i32
    %c0_i32_0 = arith.constant 0 : i32
    %c0_i32_1 = arith.constant 0 : i32
    return %c0_i32, %c0_i32_0 : i32, i32
  }
  func.func @transform_2(%arg0: i32) -> (i32, i32) {
    %c0_i32 = arith.constant 0 : i32
    %c0_i32_0 = arith.constant 0 : i32
    %c0_i32_1 = arith.constant 0 : i32
    return %c0_i32, %c0_i32_0 : i32, i32
  }
  func.func @transform_3(%arg0: i32) -> (i32, i32) {
    %c0_i32 = arith.constant 0 : i32
    %c0_i32_0 = arith.constant 0 : i32
    %c0_i32_1 = arith.constant 0 : i32
    return %c0_i32, %c0_i32_0 : i32, i32
  }
}

</mosaic_0001>

<llo_original>
// kernel: tpu_custom_call.1
$region0: #{tpu_custom_call.1}
  #allocation0 [shape = 'u32[]', space=smem, size = 0x4, offset = 0x4, fixed_abs, tag = 'smem constant byte address 0x4 - core index']
  #allocation1 [shape = 'u32[144,128]{1,0:T(1,128)}', space=vmem, size = 0x12000, scoped, tag = 'internal scratch']
  %s0 = inlined_call_operand.vmem [shape: f32[8,256], index: 0, kind: input, shape index: {}]
  %s1 = inlined_call_operand.vmem [shape: f32[256,16], index: 1, kind: input, shape index: {}]
  %s2 = inlined_call_operand.vmem [shape: f32[1,16], index: 2, kind: input, shape index: {}]
  %s3 = inlined_call_operand.hbm [shape: f32[8,16], index: 3, kind: output, shape index: {}]
  %s4 = sld [smem:[#allocation0]]
  $region22: #{tpu_custom_call.1} parent=0
    _
  %s6 = ssub.s32 1, %s4
  %s7 = scalar_select 0, %s6, %s4
  $region1: #{tpu_custom_call.1} parent=0
    #allocation2 [shape = 'u8[4096]{0}', space=vmem, size = 0x1000, scoped, tag = 'output window, operand 0, single buffered']
    #allocation3 [shape = 's32[1]{0}', space=sflag, size = 0x4, scoped, tag = 'scoped memory for tpu_custom_call.1']
    %8 = vsyncpa [#allocation3], 0
    // Predicated region
    $region2: #{tpu_custom_call.1} parent=1 // pred_check
      _
    $region3: #{tpu_custom_call.1} parent=1 // pred_check_branch
      %10 = sbr.rel (0) target = $region5
    $region4: #{tpu_custom_call.1} parent=1 // pred_region
      _
    $region5: #{tpu_custom_call.1} parent=1 // pred_fallthru
      _
    // Predicated region
    $region6: #{tpu_custom_call.1} parent=1 // pred_check
      _
    $region7: #{tpu_custom_call.1} parent=1 // pred_check_branch
      %12 = sbr.rel (0) target = $region9
    $region8: #{tpu_custom_call.1} parent=1 // pred_region
      _
    $region9: #{tpu_custom_call.1} parent=1 // pred_fallthru
      _
    // Predicated region
    $region10: #{tpu_custom_call.1} parent=1 // pred_check
      _
    $region11: #{tpu_custom_call.1} parent=1 // pred_check_branch
      %14 = sbr.rel (0) target = $region13
    $region12: #{tpu_custom_call.1} parent=1 // pred_region
      _
    $region13: #{tpu_custom_call.1} parent=1 // pred_fallthru
      _
    %v15 = vld [vmem:[%s0] sm:$0xff]
    %v16 = vld [vmem:[%s0 + $0x8] sm:$0xff]
    %v17 = vld [vmem:[%s1] sm:$0xff]
    %v18 = vld [vmem:[%s1 + $0x8] sm:$0xff]
    %v19 = vld [vmem:[%s1 + $0x10] sm:$0xff]
    %v20 = vld [vmem:[%s1 + $0x18] sm:$0xff]
    %v21 = vld [vmem:[%s1 + $0x20] sm:$0xff]
    %v22 = vld [vmem:[%s1 + $0x28] sm:$0xff]
    %v23 = vld [vmem:[%s1 + $0x30] sm:$0xff]
    %v24 = vld [vmem:[%s1 + $0x38] sm:$0xff]
    %v25 = vld [vmem:[%s1 + $0x40] sm:$0xff]
    %v26 = vld [vmem:[%s1 + $0x48] sm:$0xff]
    %v27 = vld [vmem:[%s1 + $0x50] sm:$0xff]
    %v28 = vld [vmem:[%s1 + $0x58] sm:$0xff]
    %v29 = vld [vmem:[%s1 + $0x60] sm:$0xff]
    %v30 = vld [vmem:[%s1 + $0x68] sm:$0xff]
    %v31 = vld [vmem:[%s1 + $0x70] sm:$0xff]
    %v32 = vld [vmem:[%s1 + $0x78] sm:$0xff]
    %v33 = vld [vmem:[%s1 + $0x80] sm:$0xff]
    %v34 = vld [vmem:[%s1 + $0x88] sm:$0xff]
    %v35 = vld [vmem:[%s1 + $0x90] sm:$0xff]
    %v36 = vld [vmem:[%s1 + $0x98] sm:$0xff]
    %v37 = vld [vmem:[%s1 + $0xa0] sm:$0xff]
    %v38 = vld [vmem:[%s1 + $0xa8] sm:$0xff]
    %v39 = vld [vmem:[%s1 + $0xb0] sm:$0xff]
    %v40 = vld [vmem:[%s1 + $0xb8] sm:$0xff]
    %v41 = vld [vmem:[%s1 + $0xc0] sm:$0xff]
    %v42 = vld [vmem:[%s1 + $0xc8] sm:$0xff]
    %v43 = vld [vmem:[%s1 + $0xd0] sm:$0xff]
    %v44 = vld [vmem:[%s1 + $0xd8] sm:$0xff]
    %v45 = vld [vmem:[%s1 + $0xe0] sm:$0xff]
    %v46 = vld [vmem:[%s1 + $0xe8] sm:$0xff]
    %v47 = vld [vmem:[%s1 + $0xf0] sm:$0xff]
    %v48 = vld [vmem:[%s1 + $0xf8] sm:$0xff]
    %v49 = vld [vmem:[%s2] sm:$0x1]
    %v51 = vlaneseq
    %v52 = vshrl.u32 %v51, 7
    %v53 = vsub.s32 0, %v52
    %v54 = vrot.slane %v49, %v53
    %56 = vmatprep.subr.mxu0 0.0
    %57 = vmatpush1.msra.mxu0 %v32
    %58 = vmatprep.subr.mxu0 0.0
    %59 = vmatpush1.msra.mxu0 %v31
    %60 = vmatprep.subr.mxu0 0.0
    %61 = vmatpush1.msra.mxu0 %v30
    %62 = vmatprep.subr.mxu0 0.0
    %63 = vmatpush1.msra.mxu0 %v29
    %64 = vmatprep.subr.mxu0 0.0
    %65 = vmatpush1.msra.mxu0 %v28
    %66 = vmatprep.subr.mxu0 0.0
    %67 = vmatpush1.msra.mxu0 %v27
    %68 = vmatprep.subr.mxu0 0.0
    %69 = vmatpush1.msra.mxu0 %v26
    %70 = vmatprep.subr.mxu0 0.0
    %71 = vmatpush1.msra.mxu0 %v25
    %72 = vmatprep.subr.mxu0 0.0
    %73 = vmatpush1.msra.mxu0 %v24
    %74 = vmatprep.subr.mxu0 0.0
    %75 = vmatpush1.msra.mxu0 %v23
    %76 = vmatprep.subr.mxu0 0.0
    %77 = vmatpush1.msra.mxu0 %v22
    %78 = vmatprep.subr.mxu0 0.0
    %79 = vmatpush1.msra.mxu0 %v21
    %80 = vmatprep.subr.mxu0 0.0
    %81 = vmatpush1.msra.mxu0 %v20
    %82 = vmatprep.subr.mxu0 0.0
    %83 = vmatpush1.msra.mxu0 %v19
    %84 = vmatprep.subr.mxu0 0.0
    %85 = vmatpush1.msra.mxu0 %v18
    %86 = vmatprep.subr.mxu0 0.0
    %87 = vmatpush1.msra.mxu0 %v17
    %88 = vmatprep.subr.mxu0 0.0
    %89 = vmatpush2.msra.mxu0 %v48
    %90 = vmatprep.subr.mxu0 0.0
    %91 = vmatpush2.msra.mxu0 %v47
    %92 = vmatprep.subr.mxu0 0.0
    %93 = vmatpush2.msra.mxu0 %v46
    %94 = vmatprep.subr.mxu0 0.0
    %95 = vmatpush2.msra.mxu0 %v45
    %96 = vmatprep.subr.mxu0 0.0
    %97 = vmatpush2.msra.mxu0 %v44
    %98 = vmatprep.subr.mxu0 0.0
    %99 = vmatpush2.msra.mxu0 %v43
    %100 = vmatprep.subr.mxu0 0.0
    %101 = vmatpush2.msra.mxu0 %v42
    %102 = vmatprep.subr.mxu0 0.0
    %103 = vmatpush2.msra.mxu0 %v41
    %104 = vmatprep.subr.mxu0 0.0
    %105 = vmatpush2.msra.mxu0 %v40
    %106 = vmatprep.subr.mxu0 0.0
    %107 = vmatpush2.msra.mxu0 %v39
    %108 = vmatprep.subr.mxu0 0.0
    %109 = vmatpush2.msra.mxu0 %v38
    %110 = vmatprep.subr.mxu0 0.0
    %111 = vmatpush2.msra.mxu0 %v37
    %112 = vmatprep.subr.mxu0 0.0
    %113 = vmatpush2.msra.mxu0 %v36
    %114 = vmatprep.subr.mxu0 0.0
    %115 = vmatpush2.msra.mxu0 %v35
    %116 = vmatprep.subr.mxu0 0.0
    %117 = vmatpush2.msra.mxu0 %v34
    %118 = vmatprep.subr.mxu0 0.0
    %119 = vmatpush2.msra.mxu0 %v33
    %120 = vmatprep.mubr.f32.mxu0 %v16
    %121 = vmatmul.mubr.f32.gmra.mxu0 %v15
    %v122 = vpop.f32.mrf.mxu0
    %v123 = vadd.f32 %v54, %v122
    %v124 = vpop.f32.mrf.mxu0
    %125 = vdwg.mxu0
    %vm126 = vcmask 130048
    %127 = vst.msk [vmem:[#allocation2] sm:$0xff] %vm126, %v123
    // Predicated region
    $region14: #{tpu_custom_call.1} parent=1 // pred_check
      _
    $region15: #{tpu_custom_call.1} parent=1 // pred_check_branch
      %129 = sbr.rel (0) target = $region17
    $region16: #{tpu_custom_call.1} parent=1 // pred_region
      %s131 = ssub.s32 128, 128
      %132 = vsyncadd [#allocation3], %s131
      %s134 = sshll.u32 [#allocation2], 4
      %s135 = int_to_ptr.vmem [resolvable:$true] %s134
      %137 = dma.vmem_to_hbm [thread:$0]  %s135, 128, %s3, [#allocation3]
    $region17: #{tpu_custom_call.1} parent=1 // pred_fallthru
      _
    // Predicated region
    $region18: #{tpu_custom_call.1} parent=1 // pred_check
      _
    $region19: #{tpu_custom_call.1} parent=1 // pred_check_branch
      %139 = sbr.rel (0) target = $region21
    $region20: #{tpu_custom_call.1} parent=1 // pred_region
      %140 = dma.done [#allocation3], 128
    $region21: #{tpu_custom_call.1} parent=1 // pred_fallthru
      _
    %141 = vsyncpa [#allocation3], 1

</llo_original>
